<compile_context>
chip_gen: v6e
topology: v6e:2x2x1
jax: 0.10.0
libtpu: 0.0.40
codegen_flags: <defaults>
</compile_context>

<pallas_src>
import functools

import jax
import jax.numpy as jnp
from jax.experimental import pallas as pl
from jax.experimental.pallas import tpu as pltpu


def _round_up(x, m):
    return (x + m - 1) // m * m


def _vmem_budget_bytes():
    """~75% of this generation's physical VMEM (96 MiB v5e/v6e, 48 MiB v7x)."""
    try:
        cap = int(pltpu.get_tpu_info().vmem_capacity_bytes)
    except Exception:
        cap = 64 * 1024 * 1024  # conservative: safe on every generation
    return max(32 * 1024 * 1024, (cap * 3) // 4)


def _pack_weights(weight, bias):
    """Wm[r, ci] = weight[ci, co, kd, kh, kw], r = co*8 + kd*4 + kh*2 + kw."""
    c_in, c_out = weight.shape[0], weight.shape[1]
    n_rows = c_out * 8
    w_mat = jnp.transpose(weight, (1, 2, 3, 4, 0)).reshape(n_rows, c_in)
    b_col = jnp.repeat(bias, 8).reshape(n_rows, 1)
    return w_mat, b_col


# --------------------------------------------------------------------------- #
# Primary path: matmul + in-VMEM pixel shuffle, output written once to HBM.   #
# --------------------------------------------------------------------------- #
def _fused_kernel(w_ref, b_ref, x_ref, o_ref, *, c_out, tile_d, h, w):
    # w_ref: (C_out*8, C_in)      resident weight matrix
    # b_ref: (C_out*8, 1)         resident bias column
    # x_ref: (C_in, tile_d*H*W)   one depth-slab of one batch element
    # o_ref: (C_out, 2*tile_d, 4*H*W)  final-layout output block (lane-dense)
    acc = jnp.dot(w_ref[...], x_ref[...], preferred_element_type=jnp.float32)
    acc = acc + b_ref[...]
    # rows r = (co, kd, kh, kw), lanes l = (dloc, h, w)
    t = acc.reshape(c_out, 2, 2, 2, tile_d, h, w)   # (co, kd, kh, kw, d, h, w)
    t = jnp.transpose(t, (0, 4, 1, 5, 2, 6, 3))     # (co, d, kd, h, kh, w, kw)
    o_ref[...] = t.reshape(c_out, 2 * tile_d, 4 * h * w).astype(o_ref.dtype)


def _forward_fused(x, w_mat, b_col, out_dtype, vmem_budget):
    n, c_in, d, h, w = x.shape
    n_rows = w_mat.shape[0]
    c_out = n_rows // 8
    hw = h * w

    in_item = jnp.dtype(x.dtype).itemsize
    out_item = jnp.dtype(out_dtype).itemsize
    w_bytes = w_mat.size * jnp.dtype(w_mat.dtype).itemsize + n_rows * 4

    # Depth-tile constraints:
    #   * tile_d divides D                      (no pad / partial blocks)
    #   * tile_d*H*W multiple of 128 or full S  (x block lane dim)
    #   * 2*tile_d multiple of 8 or full 2D     (out block sublane dim)
    #   * double-buffered blocks + relayout scratch fit the VMEM budget.
    def step_bytes(td):
        x_b = c_in * td * hw * in_item
        o_b = n_rows * td * hw * out_item
        scratch = 3 * n_rows * td * hw * 4      # in-kernel relayout temporaries
        return 2 * (x_b + o_b) + scratch + w_bytes

    cands = [td for td in range(1, d + 1)
             if d % td == 0
             and (td == d or ((td * hw) % 128 == 0 and td % 4 == 0))]
    fit = [td for td in cands if step_bytes(td) <= vmem_budget // 2]
    if not fit:
        raise ValueError("fused upsample tile does not fit VMEM budget")
    good = [td for td in fit if n * (d // td) >= 4]   # >=4 steps -> both v7x TCs
    tile_d = max(good) if good else max(fit)

    x_flat = x.reshape(n, c_in, d * hw)               # free view, NCDHW kept
    grid = (n, d // tile_d)

    cost = pl.CostEstimate(
        flops=int(2 * n * d * hw * c_in * n_rows),
        transcendentals=0,
        bytes_accessed=int(n * d * hw * c_in * in_item + w_bytes
                           + n * d * hw * n_rows * out_item),
    )

    y = pl.pallas_call(
        functools.partial(_fused_kernel, c_out=c_out, tile_d=tile_d, h=h, w=w),
        out_shape=jax.ShapeDtypeStruct((n, c_out, 2 * d, 4 * hw), out_dtype),
        grid_spec=pltpu.PrefetchScalarGridSpec(
            num_scalar_prefetch=0,
            grid=grid,
            in_specs=[
                pl.BlockSpec((n_rows, c_in), lambda b, di: (0, 0)),
                pl.BlockSpec((n_rows, 1), lambda b, di: (0, 0)),
                pl.BlockSpec((None, c_in, tile_d * hw), lambda b, di: (b, 0, di)),
            ],
            out_specs=pl.BlockSpec((None, c_out, 2 * tile_d, 4 * hw),
                                   lambda b, di: (b, 0, di, 0)),
        ),
        compiler_params=pltpu.CompilerParams(
            dimension_semantics=("parallel", "parallel"),
            vmem_limit_bytes=int(vmem_budget),
        ),
        cost_estimate=cost,
    )(w_mat, b_col, x_flat)

    # Free reshape: the last dim is already (h, kh, w, kw)-ordered.
    return y.reshape(n, c_out, 2 * d, 2 * h, 2 * w)


# --------------------------------------------------------------------------- #
# Fallback path: previously-validated matmul kernel + XLA shuffle epilogue.   #
# --------------------------------------------------------------------------- #
def _matmul_kernel(w_ref, b_ref, x_ref, o_ref):
    acc = jnp.dot(w_ref[...], x_ref[...], preferred_element_type=jnp.float32)
    o_ref[...] = (acc + b_ref[...]).astype(o_ref.dtype)


def _forward_unfused(x, w_mat, b_col, out_dtype, vmem_budget):
    n, c_in, d, h, w = x.shape
    n_rows = w_mat.shape[0]
    c_out = n_rows // 8
    s = d * h * w

    in_item = jnp.dtype(x.dtype).itemsize
    out_item = jnp.dtype(out_dtype).itemsize
    w_bytes = w_mat.size * jnp.dtype(w_mat.dtype).itemsize + n_rows * 4

    x_flat = x.reshape(n, c_in, s)
    s_pad = _round_up(s, 128)
    if s_pad != s:
        # Rare (spatial not a multiple of 128): pad only to the 128-lane floor.
        x_flat = jnp.pad(x_flat, ((0, 0), (0, 0), (0, s_pad - s)))

    # Largest 128-multiple tile dividing s_pad that fits the VMEM budget and
    # (preferably) still gives >=4 total grid steps.
    lane_bytes = 2 * (c_in * in_item + n_rows * out_item)
    cands = [t for t in range(128, min(s_pad, 32768) + 1, 128) if s_pad % t == 0]
    if not cands:
        cands = [s_pad]
    fit = [t for t in cands if w_bytes + t * lane_bytes <= vmem_budget // 2]
    if not fit:
        fit = cands[:1]
    good = [t for t in fit if n * (s_pad // t) >= 4]
    tile_s = max(good) if good else max(fit)

    grid = (n, s_pad // tile_s)

    cost = pl.CostEstimate(
        flops=int(2 * n * s_pad * c_in * n_rows),
        transcendentals=0,
        bytes_accessed=int(n * s_pad * c_in * in_item + w_bytes
                           + n * s_pad * n_rows * out_item),
    )

    y = pl.pallas_call(
        _matmul_kernel,
        out_shape=jax.ShapeDtypeStruct((n, n_rows, s_pad), out_dtype),
        grid_spec=pltpu.PrefetchScalarGridSpec(
            num_scalar_prefetch=0,
            grid=grid,
            in_specs=[
                pl.BlockSpec((n_rows, c_in), lambda b, si: (0, 0)),
                pl.BlockSpec((n_rows, 1), lambda b, si: (0, 0)),
                pl.BlockSpec((None, c_in, tile_s), lambda b, si: (b, 0, si)),
            ],
            out_specs=pl.BlockSpec((None, n_rows, tile_s), lambda b, si: (b, 0, si)),
        ),
        compiler_params=pltpu.CompilerParams(
            dimension_semantics=("parallel", "parallel"),
            vmem_limit_bytes=int(vmem_budget),
        ),
        cost_estimate=cost,
    )(w_mat, b_col, x_flat)

    # Pixel-shuffle epilogue (one extra HBM pass over the 8x-expanded output).
    y = y[:, :, :s].reshape(n, c_out, 2, 2, 2, d, h, w)
    y = jnp.transpose(y, (0, 1, 5, 2, 6, 3, 7, 4))
    return y.reshape(n, c_out, 2 * d, 2 * h, 2 * w)


# --------------------------------------------------------------------------- #
# Public entry point.                                                          #
# --------------------------------------------------------------------------- #
def upsample_block_forward(x, weight, bias, *, out_dtype=None,
                           fuse_pixel_shuffle=True):
    """ConvTranspose3d(in_ch, out_ch, kernel_size=2, stride=2) forward.

    x:      (N, C_in, D, H, W)        float32
    weight: (C_in, C_out, 2, 2, 2)    float32  (PyTorch ConvTranspose3d layout)
    bias:   (C_out,)                  float32
    returns (N, C_out, 2D, 2H, 2W)    out_dtype (defaults to x.dtype)
    """
    out_dtype = x.dtype if out_dtype is None else out_dtype
    w_mat, b_col = _pack_weights(weight, bias)
    budget = _vmem_budget_bytes()

    if fuse_pixel_shuffle:
        try:
            return _forward_fused(x, w_mat, b_col, out_dtype, budget)
        except Exception:
            # Mosaic could not lower / fit the in-kernel pixel shuffle for this
            # configuration -> fall back to matmul kernel + XLA shuffle.
            pass
    return _forward_unfused(x, w_mat, b_col, out_dtype, budget)


def upsample_block_reference(x, weight, bias):
    """Pure-JAX reference for ConvTranspose3d(k=2, s=2)."""
    n, c_in, d, h, w = x.shape
    c_out = weight.shape[1]
    y = jnp.einsum("nidhw,iojkl->nodhwjkl", x, weight)
    y = jnp.transpose(y, (0, 1, 2, 5, 3, 6, 4, 7)).reshape(
        n, c_out, 2 * d, 2 * h, 2 * w
    )
    return y + bias[None, :, None, None, None]


if __name__ == "__main__":
    # Small shapes consistent with a SegResNet decoder stage.
    N, C_IN, C_OUT = 2, 8, 4
    D, H, W = 4, 8, 8  # S = D*H*W = 256

    key = jax.random.PRNGKey(0)
    kx, kw, kb = jax.random.split(key, 3)

    x = jax.random.normal(kx, (N, C_IN, D, H, W), dtype=jnp.float32)
    # PyTorch ConvTranspose3d weight layout: (in_channels, out_channels, kD, kH, kW).
    weight = 0.1 * jax.random.normal(kw, (C_IN, C_OUT, 2, 2, 2), dtype=jnp.float32)
    bias = 0.1 * jax.random.normal(kb, (C_OUT,), dtype=jnp.float32)

    out = jax.block_until_ready(upsample_block_forward(x, weight, bias))
    ref = jax.block_until_ready(upsample_block_reference(x, weight, bias))

    assert out.shape == (N, C_OUT, 2 * D, 2 * H, 2 * W), out.shape
    err = float(jnp.max(jnp.abs(out - ref)))
    assert jnp.allclose(out, ref, atol=1e-5, rtol=1e-5), err
    print("KERNEL_OK")
</pallas_src>

<mosaic_0001>
module attributes {stable_mosaic.version = 11 : i64} {
  func.func @_fused_kernel(%arg0: i32, %arg1: i32, %arg2: memref<32x8xf32, #tpu.memory_space<vmem>>, %arg3: memref<32x1xf32, #tpu.memory_space<vmem>>, %arg4: memref<1x8x256xf32, #tpu.memory_space<vmem>>, %arg5: memref<1x4x8x256xf32, #tpu.memory_space<vmem>>) attributes {dimension_semantics = [#tpu.dimension_semantics<parallel>, #tpu.dimension_semantics<parallel>], iteration_bounds = array<i64: 2, 1>, scalar_prefetch = 0 : i64, scratch_operands = 0 : i64, tpu.core_type = #tpu.core_type<tc>, window_params = [{pipeline_mode = #tpu.pipeline_mode<synchronous>, transform_indices = @transform_0, window_bounds = array<i64: 32, 8>}, {pipeline_mode = #tpu.pipeline_mode<synchronous>, transform_indices = @transform_1, window_bounds = array<i64: 32, 1>}, {transform_indices = @transform_2, window_bounds = array<i64: 1, 8, 256>}, {transform_indices = @transform_3, window_bounds = array<i64: 1, 4, 8, 256>}]} {
    %c0 = arith.constant 0 : index
    %c0_0 = arith.constant 0 : index
    %0 = vector.load %arg2[%c0, %c0_0] : memref<32x8xf32, #tpu.memory_space<vmem>>, vector<32x8xf32>
    %c0_1 = arith.constant 0 : index
    %c0_2 = arith.constant 0 : index
    %c0_3 = arith.constant 0 : index
    %1 = vector.load %arg4[%c0_1, %c0_2, %c0_3] : memref<1x8x256xf32, #tpu.memory_space<vmem>>, vector<1x8x256xf32>
    %2 = vector.shape_cast %1 : vector<1x8x256xf32> to vector<8x256xf32>
    %cst = arith.constant dense<0.000000e+00> : vector<32x256xf32>
    %3 = tpu.matmul %0, %2, %cst {dimension_numbers = #tpu.dot_dimension_numbers<[1], [0], [0], [1], [0, 0, 1, 1], [], []>} : vector<32x8xf32>, vector<8x256xf32>, vector<32x256xf32> -> vector<32x256xf32>
    %c0_4 = arith.constant 0 : index
    %c0_5 = arith.constant 0 : index
    %4 = vector.load %arg3[%c0_4, %c0_5] : memref<32x1xf32, #tpu.memory_space<vmem>>, vector<32x1xf32>
    %5 = vector.broadcast %4 : vector<32x1xf32> to vector<32x256xf32>
    %6 = arith.addf %3, %5 : vector<32x256xf32>
    %7 = vector.shape_cast %6 : vector<32x256xf32> to vector<4x2x2x2x4x8x8xf32>
    %8 = tpu.transpose %7, [0, 4, 1, 5, 2, 6, 3] : vector<4x2x2x2x4x8x8xf32> -> vector<4x4x2x8x2x8x2xf32>
    %9 = vector.shape_cast %8 : vector<4x4x2x8x2x8x2xf32> to vector<4x8x256xf32>
    %c0_6 = arith.constant 0 : index
    %c0_7 = arith.constant 0 : index
    %c0_8 = arith.constant 0 : index
    %c0_9 = arith.constant 0 : index
    %10 = vector.load %arg5[%c0_6, %c0_7, %c0_8, %c0_9] : memref<1x4x8x256xf32, #tpu.memory_space<vmem>>, vector<1x4x8x256xf32>
    %11 = vector.shape_cast %10 : vector<1x4x8x256xf32> to vector<4x8x256xf32>
    %12 = vector.shape_cast %9 : vector<4x8x256xf32> to vector<1x4x8x256xf32>
    tpu.vector_store %arg5[%c0_6, %c0_7, %c0_8, %c0_9], %12 {strides = array<i32>} : memref<1x4x8x256xf32, #tpu.memory_space<vmem>>, vector<1x4x8x256xf32>,
    return
  }
  func.func @transform_0(%arg0: i32, %arg1: i32) -> (i32, i32) {
    %c0_i32 = arith.constant 0 : i32
    %c0_i32_0 = arith.constant 0 : i32
    %c0_i32_1 = arith.constant 0 : i32
    return %c0_i32, %c0_i32_0 : i32, i32
  }
  func.func @transform_1(%arg0: i32, %arg1: i32) -> (i32, i32) {
    %c0_i32 = arith.constant 0 : i32
    %c0_i32_0 = arith.constant 0 : i32
    %c0_i32_1 = arith.constant 0 : i32
    return %c0_i32, %c0_i32_0 : i32, i32
  }
  func.func @transform_2(%arg0: i32, %arg1: i32) -> (i32, i32, i32) {
    %c0_i32 = arith.constant 0 : i32
    %c0_i32_0 = arith.constant 0 : i32
    return %arg0, %c0_i32, %arg1 : i32, i32, i32
  }
  func.func @transform_3(%arg0: i32, %arg1: i32) -> (i32, i32, i32, i32) {
    %c0_i32 = arith.constant 0 : i32
    %c0_i32_0 = arith.constant 0 : i32
    %c0_i32_1 = arith.constant 0 : i32
    return %arg0, %c0_i32, %arg1, %c0_i32_0 : i32, i32, i32, i32
  }
}

module attributes {stable_mosaic.version = 11 : i64} {
  func.func @_matmul_kernel(%arg0: i32, %arg1: i32, %arg2: memref<32x8xf32, #tpu.memory_space<vmem>>, %arg3: memref<32x1xf32, #tpu.memory_space<vmem>>, %arg4: memref<1x8x128xf32, #tpu.memory_space<vmem>>, %arg5: memref<1x32x128xf32, #tpu.memory_space<vmem>>) attributes {dimension_semantics = [#tpu.dimension_semantics<parallel>, #tpu.dimension_semantics<parallel>], iteration_bounds = array<i64: 2, 2>, scalar_prefetch = 0 : i64, scratch_operands = 0 : i64, tpu.core_type = #tpu.core_type<tc>, window_params = [{pipeline_mode = #tpu.pipeline_mode<synchronous>, transform_indices = @transform_0, window_bounds = array<i64: 32, 8>}, {pipeline_mode = #tpu.pipeline_mode<synchronous>, transform_indices = @transform_1, window_bounds = array<i64: 32, 1>}, {transform_indices = @transform_2, window_bounds = array<i64: 1, 8, 128>}, {transform_indices = @transform_3, window_bounds = array<i64: 1, 32, 128>}]} {
    %c0 = arith.constant 0 : index
    %c0_0 = arith.constant 0 : index
    %0 = vector.load %arg2[%c0, %c0_0] : memref<32x8xf32, #tpu.memory_space<vmem>>, vector<32x8xf32>
    %c0_1 = arith.constant 0 : index
    %c0_2 = arith.constant 0 : index
    %c0_3 = arith.constant 0 : index
    %1 = vector.load %arg4[%c0_1, %c0_2, %c0_3] : memref<1x8x128xf32, #tpu.memory_space<vmem>>, vector<1x8x128xf32>
    %2 = vector.shape_cast %1 : vector<1x8x128xf32> to vector<8x128xf32>
    %cst = arith.constant dense<0.000000e+00> : vector<32x128xf32>
    %3 = tpu.matmul %0, %2, %cst {dimension_numbers = #tpu.dot_dimension_numbers<[1], [0], [0], [1], [0, 0, 1, 1], [], []>} : vector<32x8xf32>, vector<8x128xf32>, vector<32x128xf32> -> vector<32x128xf32>
    %c0_4 = arith.constant 0 : index
    %c0_5 = arith.constant 0 : index
    %4 = vector.load %arg3[%c0_4, %c0_5] : memref<32x1xf32, #tpu.memory_space<vmem>>, vector<32x1xf32>
    %5 = vector.broadcast %4 : vector<32x1xf32> to vector<32x128xf32>
    %6 = arith.addf %3, %5 : vector<32x128xf32>
    %c0_6 = arith.constant 0 : index
    %c0_7 = arith.constant 0 : index
    %c0_8 = arith.constant 0 : index
    %7 = vector.load %arg5[%c0_6, %c0_7, %c0_8] : memref<1x32x128xf32, #tpu.memory_space<vmem>>, vector<1x32x128xf32>
    %8 = vector.shape_cast %7 : vector<1x32x128xf32> to vector<32x128xf32>
    %9 = vector.shape_cast %6 : vector<32x128xf32> to vector<1x32x128xf32>
    tpu.vector_store %arg5[%c0_6, %c0_7, %c0_8], %9 {strides = array<i32>} : memref<1x32x128xf32, #tpu.memory_space<vmem>>, vector<1x32x128xf32>,
    return
  }
  func.func @transform_0(%arg0: i32, %arg1: i32) -> (i32, i32) {
    %c0_i32 = arith.constant 0 : i32
    %c0_i32_0 = arith.constant 0 : i32
    %c0_i32_1 = arith.constant 0 : i32
    return %c0_i32, %c0_i32_0 : i32, i32
  }
  func.func @transform_1(%arg0: i32, %arg1: i32) -> (i32, i32) {
    %c0_i32 = arith.constant 0 : i32
    %c0_i32_0 = arith.constant 0 : i32
    %c0_i32_1 = arith.constant 0 : i32
    return %c0_i32, %c0_i32_0 : i32, i32
  }
  func.func @transform_2(%arg0: i32, %arg1: i32) -> (i32, i32, i32) {
    %c0_i32 = arith.constant 0 : i32
    %c0_i32_0 = arith.constant 0 : i32
    return %arg0, %c0_i32, %arg1 : i32, i32, i32
  }
  func.func @transform_3(%arg0: i32, %arg1: i32) -> (i32, i32, i32) {
    %c0_i32 = arith.constant 0 : i32
    %c0_i32_0 = arith.constant 0 : i32
    return %arg0, %c0_i32, %arg1 : i32, i32, i32
  }
}

</mosaic_0001>

<llo_original>
// kernel: tpu_custom_call.1
$region0: #{tpu_custom_call.1}
  #allocation0 [shape = 'u32[]', space=smem, size = 0x4, offset = 0x4, fixed_abs, tag = 'smem constant byte address 0x4 - core index']
  #allocation1 [shape = 'u32[144,128]{1,0:T(1,128)}', space=vmem, size = 0x12000, scoped, tag = 'internal scratch']
  %s0 = inlined_call_operand.vmem [shape: f32[32,8], index: 0, kind: input, shape index: {}]
  %s1 = inlined_call_operand.vmem [shape: f32[32,1], index: 1, kind: input, shape index: {}]
  %s2 = inlined_call_operand.vmem [shape: f32[2,8,256], index: 2, kind: input, shape index: {}]
  %s3 = inlined_call_operand.hbm [shape: f32[2,32,256], index: 3, kind: output, shape index: {}]
  %s4 = sld [smem:[#allocation0]]
  $region45: #{tpu_custom_call.1} parent=0
    _
  %s6 = ssub.s32 1, %s4
  %s7 = scalar_select 0, %s6, %s4
  $region1: #{tpu_custom_call.1} parent=0
    #allocation2 [shape = 'u8[32768]{0}', space=vmem, size = 0x8000, scoped, tag = 'output window, operand 0']
    #allocation3 [shape = 's32[2]{0}', space=sflag, size = 0x8, scoped, tag = 'scoped memory for tpu_custom_call.1']
    %8 = vsyncpa [#allocation3], 0
    %s9 = scalar_lea.sflag [#allocation3], 1
    %10 = vsyncpa %s9, 0
    loop: start=0, step=1, limit=6
    $region2: #{tpu_custom_call.1} parent=1 // loop_pre_header
      _
    $region3: #{tpu_custom_call.1} parent=1 // loop_header
      %s12 = sphi 0, %s16
      %p13 = scmp.ge.s32.totalorder %s12, 6
      %s19 = sphi 0, %s31
      %s20 = sphi 0, %s27
      %s21 = sphi 0, %s19
      %s22 = sphi 0, %s20
      %s23 = sphi 0, %s21
      %s24 = sphi 0, %s22
      %s32 = sphi 0, %s32
      %s34 = sphi 0, %s32
      %s35 = sphi 0, %s34
      %s49 = sphi 0, %s35
      %s53 = sphi 0, %s53
      %s55 = sphi 0, %s53
      %s56 = sphi 0, %s55
      %s70 = sphi 0, %s56
      %s78 = sphi 0, %s80
      %s81 = sphi 0, %s78
      %s82 = sphi 0, %s81
      %s98 = sphi 0, %s82
      %s106 = sphi 0, %s108
      %s109 = sphi 0, %s106
      %s110 = sphi 0, %s109
      %s126 = sphi 0, %s110
    $region4: #{tpu_custom_call.1} parent=1 // loop_header_branch
      %15 = sbr.rel (%p13) target = $region8
    $region5: #{tpu_custom_call.1} parent=1 // loop_body
      %s17 = ssub.s32 %s12, 1
      %s18 = ssub.s32 %s12, 2
      %s25 = sadd.s32 1, %s20
      %p26 = scmp.ge.s32.totalorder %s25, 2
      %s27 = scalar_select %p26, 0, %s25
      %s28 = sadd.s32 1, %s19
      %s29 = scalar_select %p26, %s28, %s19
      %p30 = scmp.ge.s32.totalorder %s29, 2
      %s31 = scalar_select %p30, 0, %s29
      %s33 = sadd.s32 %s32, 1
      %p36 = scmp.eq.s32.totalorder %s12, 3
      %p37 = scmp.ne.s32.totalorder %s32, %s34
      %p38 = scmp.eq.s32.totalorder %s12, 0
      %p39 = por %p37, %p38
      %p40 = scmp.ne.s32.totalorder %s32, %s34
      %p41 = scmp.eq.s32.totalorder %s17, 3
      %p42 = por %p40, %p41
      %p43 = scmp.ne.s32.totalorder %s34, %s35
      %p44 = scmp.eq.s32.totalorder %s17, 0
      %p45 = por %p43, %p44
      %p46 = scmp.ne.s32.totalorder %s34, %s35
      %p47 = scmp.eq.s32.totalorder %s18, 3
      %p48 = por %p46, %p47
      %p50 = scmp.ne.s32.totalorder %s35, %s49
      %p51 = scmp.eq.s32.totalorder %s18, 0
      %p52 = por %p50, %p51
      %s54 = sadd.s32 %s53, 1
      %p57 = scmp.eq.s32.totalorder %s12, 3
      %p58 = scmp.ne.s32.totalorder %s53, %s55
      %p59 = scmp.eq.s32.totalorder %s12, 0
      %p60 = por %p58, %p59
      %p61 = scmp.ne.s32.totalorder %s53, %s55
      %p62 = scmp.eq.s32.totalorder %s17, 3
      %p63 = por %p61, %p62
      %p64 = scmp.ne.s32.totalorder %s55, %s56
      %p65 = scmp.eq.s32.totalorder %s17, 0
      %p66 = por %p64, %p65
      %p67 = scmp.ne.s32.totalorder %s55, %s56
      %p68 = scmp.eq.s32.totalorder %s18, 3
      %p69 = por %p67, %p68
      %p71 = scmp.ne.s32.totalorder %s56, %s70
      %p72 = scmp.eq.s32.totalorder %s18, 0
      %p73 = por %p71, %p72
      %s74 = ssub.s32 %s19, %s31
      %s75 = ssub.s32 %s20, %s27
      %s76 = sor.u32 %s74, %s75
      %p77 = scmp.eq.s32.totalorder %s76, 0
      %s79 = sadd.s32 %s78, 1
      %s80 = scalar_select %p77, %s78, %s79
      %p83 = pneg %p77
      %p84 = scmp.eq.s32.totalorder %s12, 3
      %p85 = por %p83, %p84
      %p86 = scmp.ne.s32.totalorder %s78, %s81
      %p87 = scmp.eq.s32.totalorder %s12, 0
      %p88 = por %p86, %p87
      %p89 = scmp.ne.s32.totalorder %s78, %s81
      %p90 = scmp.eq.s32.totalorder %s17, 3
      %p91 = por %p89, %p90
      %p92 = scmp.ne.s32.totalorder %s81, %s82
      %p93 = scmp.eq.s32.totalorder %s17, 0
      %p94 = por %p92, %p93
      %p95 = scmp.ne.s32.totalorder %s81, %s82
      %p96 = scmp.eq.s32.totalorder %s18, 3
      %p97 = por %p95, %p96
      %p99 = scmp.ne.s32.totalorder %s82, %s98
      %p100 = scmp.eq.s32.totalorder %s18, 0
      %p101 = por %p99, %p100
      %s102 = ssub.s32 %s19, %s31
      %s103 = ssub.s32 %s20, %s27
      %s104 = sor.u32 %s102, %s103
      %p105 = scmp.eq.s32.totalorder %s104, 0
      %s107 = sadd.s32 %s106, 1
      %s108 = scalar_select %p105, %s106, %s107
      %p111 = pneg %p105
      %p112 = scmp.eq.s32.totalorder %s12, 3
      %p113 = por %p111, %p112
      %p114 = scmp.ne.s32.totalorder %s106, %s109
      %p115 = scmp.eq.s32.totalorder %s12, 0
      %p116 = por %p114, %p115
      %p117 = scmp.ne.s32.totalorder %s106, %s109
      %p118 = scmp.eq.s32.totalorder %s17, 3
      %p119 = por %p117, %p118
      %p120 = scmp.ne.s32.totalorder %s109, %s110
      %p121 = scmp.eq.s32.totalorder %s17, 0
      %p122 = por %p120, %p121
      %p123 = scmp.ne.s32.totalorder %s109, %s110
      %p124 = scmp.eq.s32.totalorder %s18, 3
      %p125 = por %p123, %p124
      %p127 = scmp.ne.s32.totalorder %s110, %s126
      %p128 = scmp.eq.s32.totalorder %s18, 0
      %p129 = por %p127, %p128
      %p130 = scmp.le.s32.totalorder 1, %s12
      %p131 = scmp.lt.s32.totalorder %s12, 5
      %p132 = pnand %p130, %p131
      %p133 = pneg %p132
      // Predicated region
      $region9: #{tpu_custom_call.1} parent=5 // pred_check
        _
      $region10: #{tpu_custom_call.1} parent=5 // pred_check_branch
        %135 = sbr.rel (%p132) target = $region12
      $region11: #{tpu_custom_call.1} parent=5 // pred_region
        %s136 = ssub.s32 %s12, 1
        // Predicated region
        $region13: #{tpu_custom_call.1} parent=11 // pred_check
          %p137 = pneg %p45
        $region14: #{tpu_custom_call.1} parent=11 // pred_check_branch
          %139 = sbr.rel (%p137) target = $region16
        $region15: #{tpu_custom_call.1} parent=11 // pred_region
          _
        $region16: #{tpu_custom_call.1} parent=11 // pred_fallthru
          _
        // Predicated region
        $region17: #{tpu_custom_call.1} parent=11 // pred_check
          %p140 = pneg %p66
        $region18: #{tpu_custom_call.1} parent=11 // pred_check_branch
          %142 = sbr.rel (%p140) target = $region20
        $region19: #{tpu_custom_call.1} parent=11 // pred_region
          _
        $region20: #{tpu_custom_call.1} parent=11 // pred_fallthru
          _
      $region12: #{tpu_custom_call.1} parent=5 // pred_fallthru
        _
      %p143 = scmp.lt.s32.totalorder %s12, 4
      // Predicated region
      $region21: #{tpu_custom_call.1} parent=5 // pred_check
        %p144 = pneg %p143
      $region22: #{tpu_custom_call.1} parent=5 // pred_check_branch
        %146 = sbr.rel (%p144) target = $region24
      $region23: #{tpu_custom_call.1} parent=5 // pred_region
        // Predicated region
        $region25: #{tpu_custom_call.1} parent=23 // pred_check
          %p147 = pneg %p88
        $region26: #{tpu_custom_call.1} parent=23 // pred_check_branch
          %149 = sbr.rel (%p147) target = $region28
        $region27: #{tpu_custom_call.1} parent=23 // pred_region
          %p150 = scmp.lt.s32.totalorder %s19, 1
          %s151 = scalar_select %p150, %s19, 1
          %p152 = scmp.lt.s32.totalorder %s20, 1
          %s153 = scalar_select %p152, %s20, 1
          %s154 = smul.addr %s151, 2
          %s155 = sadd.s32 %s153, %s154
          %s156 = smul.addr %s155, 8
          %s157 = scalar_lea.vmem %s2, %s156
        $region28: #{tpu_custom_call.1} parent=23 // pred_fallthru
          _
      $region24: #{tpu_custom_call.1} parent=5 // pred_fallthru
        _
      %p158 = scmp.le.s32.totalorder 1, %s12
      %p159 = scmp.lt.s32.totalorder %s12, 5
      %p160 = pnand %p158, %p159
      %p161 = pneg %p160
      // Predicated region
      $region29: #{tpu_custom_call.1} parent=5 // pred_check
        _
      $region30: #{tpu_custom_call.1} parent=5 // pred_check_branch
        %163 = sbr.rel (%p160) target = $region32
      $region31: #{tpu_custom_call.1} parent=5 // pred_region
        %s164 = ssub.s32 %s12, 1
        %p165 = pneg %p45
        %p166 = pneg %p42
        %p167 = pneg %p66
        %p168 = pneg %p63
        %p169 = scmp.lt.s32.totalorder %s21, 1
        %s170 = scalar_select %p169, %s21, 1
        %p171 = scmp.lt.s32.totalorder %s22, 1
        %s172 = scalar_select %p171, %s22, 1
        %s173 = smul.addr %s170, 2
        %s174 = sadd.s32 %s172, %s173
        %s175 = smul.addr %s174, 8
        %s176 = scalar_lea.vmem %s2, %s175
        %p177 = pneg %p94
        %p178 = pneg %p91
        %p179 = pneg %p122
        %p180 = pneg %p119
        %s181 = sand.u32 %s109, 1
        %s182 = scalar_lea.sflag [#allocation3], %s181
        %s183 = sand.u32 %s109, 1
        %s184 = smul.addr %s183, 32
        %s185 = scalar_lea.vmem [#allocation2], %s184
        %p186 = scmp.lt.s32.totalorder %s21, 1
        %s187 = scalar_select %p186, %s21, 1
        %p188 = scmp.lt.s32.totalorder %s22, 1
        %s189 = scalar_select %p188, %s22, 1
        %s190 = smul.addr %s187, 2
        %s191 = sadd.s32 %s189, %s190
        %s192 = smul.addr %s191, 8
        %s193 = scalar_lea.vmem %s2, %s192
        %v194 = vld [vmem:[%s0] sm:$0xff]
        %v195 = vld [vmem:[%s0 + $0x8] sm:$0xff]
        %v196 = vld [vmem:[%s0 + $0x10] sm:$0xff]
        %v197 = vld [vmem:[%s0 + $0x18] sm:$0xff]
        %v198 = vld [vmem:[%s193] sm:$0xff]
        %v199 = vld [vmem:[%s1] sm:$0xff]
        %v200 = vld [vmem:[%s1 + $0x8] sm:$0xff]
        %v201 = vld [vmem:[%s1 + $0x10] sm:$0xff]
        %v202 = vld [vmem:[%s1 + $0x18] sm:$0xff]
        %204 = vset.pattern.permute.xlu0 0
        %205 = vperm.xlu0 %204, %v199
        %v206 = vpop.permute.xlu0 %205
        %209 = vset.pattern.permute.xlu0 0
        %210 = vperm.xlu0 %209, %v200
        %v211 = vpop.permute.xlu0 %210
        %214 = vset.pattern.permute.xlu0 0
        %215 = vperm.xlu0 %214, %v201
        %v216 = vpop.permute.xlu0 %215
        %219 = vset.pattern.permute.xlu0 0
        %220 = vperm.xlu0 %219, %v202
        %v221 = vpop.permute.xlu0 %220
        %vm223 = vcmask 64512
        %v225 = vsel %vm223, %v194, 0
        %v228 = vsel %vm223, %v195, 0
        %v231 = vsel %vm223, %v196, 0
        %v234 = vsel %vm223, %v197, 0
        %236 = vmatprep.subr.mxu0 0.0
        %237 = vmatpush1.msra.mxu0 0.0
        %238 = vmatprep.subr.mxu0 0.0
        %239 = vmatpush1.msra.mxu0 0.0
        %240 = vmatprep.subr.mxu0 0.0
        %241 = vmatpush1.msra.mxu0 0.0
        %242 = vmatprep.subr.mxu0 0.0
        %243 = vmatpush1.msra.mxu0 0.0
        %244 = vmatprep.subr.mxu0 0.0
        %245 = vmatpush1.msra.mxu0 0.0
        %246 = vmatprep.subr.mxu0 0.0
        %247 = vmatpush1.msra.mxu0 0.0
        %248 = vmatprep.subr.mxu0 0.0
        %249 = vmatpush1.msra.mxu0 0.0
        %250 = vmatprep.subr.mxu0 0.0
        %251 = vmatpush1.msra.mxu0 0.0
        %252 = vmatprep.subr.mxu0 0.0
        %253 = vmatpush1.msra.mxu0 0.0
        %254 = vmatprep.subr.mxu0 0.0
        %255 = vmatpush1.msra.mxu0 0.0
        %256 = vmatprep.subr.mxu0 0.0
        %257 = vmatpush1.msra.mxu0 0.0
        %258 = vmatprep.subr.mxu0 0.0
        %259 = vmatpush1.msra.mxu0 0.0
        %260 = vmatprep.subr.mxu0 0.0
        %261 = vmatpush1.msra.mxu0 0.0
        %262 = vmatprep.subr.mxu0 0.0
        %263 = vmatpush1.msra.mxu0 0.0
        %264 = vmatprep.subr.mxu0 0.0
        %265 = vmatpush1.msra.mxu0 0.0
        %266 = vmatprep.subr.mxu0 0.0
        %267 = vmatpush1.msra.mxu0 %v198
        %268 = vmatprep.subr.mxu0 0.0
        %269 = vmatpush2.msra.mxu0 0.0
        %270 = vmatprep.subr.mxu0 0.0
        %271 = vmatpush2.msra.mxu0 0.0
        %272 = vmatprep.subr.mxu0 0.0
        %273 = vmatpush2.msra.mxu0 0.0
        %274 = vmatprep.subr.mxu0 0.0
        %275 = vmatpush2.msra.mxu0 0.0
        %276 = vmatprep.subr.mxu0 0.0
        %277 = vmatpush2.msra.mxu0 0.0
        %278 = vmatprep.subr.mxu0 0.0
        %279 = vmatpush2.msra.mxu0 0.0
        %280 = vmatprep.subr.mxu0 0.0
        %281 = vmatpush2.msra.mxu0 0.0
        %282 = vmatprep.subr.mxu0 0.0
        %283 = vmatpush2.msra.mxu0 0.0
        %284 = vmatprep.subr.mxu0 0.0
        %285 = vmatpush2.msra.mxu0 0.0
        %286 = vmatprep.subr.mxu0 0.0
        %287 = vmatpush2.msra.mxu0 0.0
        %288 = vmatprep.subr.mxu0 0.0
        %289 = vmatpush2.msra.mxu0 0.0
        %290 = vmatprep.subr.mxu0 0.0
        %291 = vmatpush2.msra.mxu0 0.0
        %292 = vmatprep.subr.mxu0 0.0
        %293 = vmatpush2.msra.mxu0 0.0
        %294 = vmatprep.subr.mxu0 0.0
        %295 = vmatpush2.msra.mxu0 0.0
        %296 = vmatprep.subr.mxu0 0.0
        %297 = vmatpush2.msra.mxu0 0.0
        %298 = vmatprep.subr.mxu0 0.0
        %299 = vmatpush2.msra.mxu0 0.0
        %300 = vmatprep.mubr.f32.mxu0 0.0
        %301 = vmatmul.mubr.f32.gmra.mxu0 %v225
        %v302 = vpop.f32.mrf.mxu0
        %v303 = vadd.f32 %v206, %v302
        %v304 = vpop.f32.mrf.mxu0
        %305 = vmatprep.mubr.f32.mxu0 0.0
        %306 = vmatmul.mubr.f32.gmra.mxu0 %v228
        %v307 = vpop.f32.mrf.mxu0
        %v308 = vadd.f32 %v211, %v307
        %v309 = vpop.f32.mrf.mxu0
        %310 = vmatprep.mubr.f32.mxu0 0.0
        %311 = vmatmul.mubr.f32.gmra.mxu0 %v231
        %v312 = vpop.f32.mrf.mxu0
        %v313 = vadd.f32 %v216, %v312
        %v314 = vpop.f32.mrf.mxu0
        %315 = vmatprep.mubr.f32.mxu0 0.0
        %316 = vmatmul.mubr.f32.gmra.mxu0 %v234
        %v317 = vpop.f32.mrf.mxu0
        %v318 = vadd.f32 %v221, %v317
        %v319 = vpop.f32.mrf.mxu0
        %320 = vdwg.mxu0
        %321 = vst [vmem:[%s185] sm:$0xff] %v303
        %322 = vst [vmem:[%s185 + $0x8] sm:$0xff] %v308
        %323 = vst [vmem:[%s185 + $0x10] sm:$0xff] %v313
        %324 = vst [vmem:[%s185 + $0x18] sm:$0xff] %v318
        %s325 = sand.u32 %s109, 1
        %s326 = scalar_lea.sflag [#allocation3], %s325
        %s327 = sand.u32 %s109, 1
        %s328 = smul.addr %s327, 32
        %s329 = scalar_lea.vmem [#allocation2], %s328
        // Predicated region
        $region33: #{tpu_custom_call.1} parent=31 // pred_check
          %p330 = pneg %p119
        $region34: #{tpu_custom_call.1} parent=31 // pred_check_branch
          %332 = sbr.rel (%p330) target = $region36
        $region35: #{tpu_custom_call.1} parent=31 // pred_region
          %s334 = ssub.s32 512, 512
          %335 = vsyncadd %s326, %s334
          %s336 = smul.addr %s21, 8
          %s337 = sadd.s32 %s22, %s336
          %s338 = smul.addr %s337, 128
          %s339 = scalar_lea.hbm %s3, %s338
          %s340 = sshll.u32 %s329, 4
          %s341 = int_to_ptr.vmem [resolvable:$true] %s340
          %346 = dma.vmem_to_hbm [thread:$0]  %s341, 512, %s339, %s326, 128, 256, 8
        $region36: #{tpu_custom_call.1} parent=31 // pred_fallthru
          _
      $region32: #{tpu_custom_call.1} parent=5 // pred_fallthru
        _
      %p347 = scmp.le.s32.totalorder 2, %s12
      // Predicated region
      $region37: #{tpu_custom_call.1} parent=5 // pred_check
        %p348 = pneg %p347
      $region38: #{tpu_custom_call.1} parent=5 // pred_check_branch
        %350 = sbr.rel (%p348) target = $region40
      $region39: #{tpu_custom_call.1} parent=5 // pred_region
        %s351 = ssub.s32 %s12, 2
        // Predicated region
        $region41: #{tpu_custom_call.1} parent=39 // pred_check
          %p352 = pneg %p125
        $region42: #{tpu_custom_call.1} parent=39 // pred_check_branch
          %354 = sbr.rel (%p352) target = $region44
        $region43: #{tpu_custom_call.1} parent=39 // pred_region
          %s355 = sand.u32 %s110, 1
          %s356 = scalar_lea.sflag [#allocation3], %s355
          %s357 = sand.u32 %s110, 1
          %s358 = smul.addr %s357, 32
          %s359 = scalar_lea.vmem [#allocation2], %s358
          %360 = dma.done %s356, 512
        $region44: #{tpu_custom_call.1} parent=39 // pred_fallthru
          _
      $region40: #{tpu_custom_call.1} parent=5 // pred_fallthru
        _
    $region6: #{tpu_custom_call.1} parent=1 // loop_footer
      %s16 = sadd.s32 1, %s12
    $region7: #{tpu_custom_call.1} parent=1 // loop_footer_branch
      %11 = sbr.rel target = $region3
    $region8: #{tpu_custom_call.1} parent=1 // loop_exit
      _
    %361 = vsyncpa [#allocation3], 1
    %s362 = scalar_lea.sflag [#allocation3], 1
    %363 = vsyncpa %s362, 1

</llo_original>
